<compile_context>
chip_gen: v5e
topology: v5e:2x2
jax: 0.10.0
libtpu: 0.0.40
codegen_flags: <defaults>
</compile_context>

<pallas_src>
import functools

import jax
import jax.numpy as jnp
from jax import lax
from jax.experimental import pallas as pl
from jax.experimental.pallas import tpu as pltpu


def _round_up(x, m):
    return (x + m - 1) // m * m


def _vmem_capacity_bytes():
    """Physical per-core VMEM, or None if the trace-time query is unavailable."""
    try:
        return int(pltpu.get_tpu_info().vmem_capacity_bytes)
    except Exception:
        return None


def _auto_tile_rows(n, c, itemsize, row_budget_bytes):
    """Rows per tile from a VMEM byte budget (no arbitrary row cap)."""
    per_row = 2 * c * itemsize          # double-buffered logits input block
    per_row += 3 * c * 4                # f32 intermediates (upcast / exp / select temp)
    per_row += 2 * 128 * 4              # lane-padded (tile_n, 1) int32 targets, x2 buffers
    rows = row_budget_bytes // max(per_row, 1)
    rows = max(8, (rows // 8) * 8)
    return int(min(rows, _round_up(n, 8)))


def _focal_loss_kernel(logits_ref, targets_ref, out_ref, *, alpha, gamma, n, tile_n):
    # logits_ref: (tile_n, C) float   targets_ref: (tile_n, 1) int32
    # out_ref:    (1, 8, 128) f32 -- this tile's partial sum, broadcast lane-dense.
    i = pl.program_id(0)

    logits = logits_ref[...].astype(jnp.float32)            # (tile_n, C)
    tgt = targets_ref[...]                                   # (tile_n, 1) int32
    tn, c = logits.shape

    # Ragged-last-tile mask: rows >= N contribute 0.  This MUST stay a select
    # (not a mask-multiply): padded rows may hold garbage that becomes NaN/inf.
    row = i * tile_n + lax.broadcasted_iota(jnp.int32, (tn, 1), 0)
    valid = row < n                                           # (tile_n, 1)

    # One-hot via compare against a (1, C) column iota; the compare broadcasts
    # it to (tile_n, C) so no full-tile iota is materialised per step.
    col = lax.broadcasted_iota(jnp.int32, (1, c), 1)          # (1, C)
    onehot = col == tgt                                       # (tile_n, C)

    # Numerically stable softmax pieces.  Raw logits are touched once (shift);
    # the target extraction re-uses the exp array, and there is no per-row
    # exp(-ce) tail.
    m = jnp.max(logits, axis=-1, keepdims=True)               # (tile_n, 1)
    e = jnp.exp(logits - m)                                    # (tile_n, C)
    sum_exp = jnp.sum(e, axis=-1, keepdims=True)               # (tile_n, 1)
    exp_tgt = jnp.sum(jnp.where(onehot, e, 0.0), axis=-1, keepdims=True)

    # pt = softmax[target] in (0, 1]; clamp away exact 0 (only reachable when
    # the target logit sits ~88+ below the row max) so the log stays finite.
    pt = exp_tgt / sum_exp
    pt = jnp.maximum(pt, jnp.float32(jnp.finfo(jnp.float32).tiny))
    ce = -jnp.log(pt)                                          # (tile_n, 1)

    # Focal weighting: alpha * (1 - pt)^gamma * ce.
    base = jnp.maximum(1.0 - pt, 0.0)
    if float(gamma) == int(gamma) and gamma >= 0:
        w = lax.integer_pow(base, int(gamma))                  # VPU multiplies only
    else:
        w = base ** jnp.float32(gamma)
    focal = jnp.float32(alpha) * w * ce
    focal = jnp.where(valid, focal, 0.0)                        # select, NaN-safe

    psum = jnp.sum(focal, keepdims=True)                        # (1, 1)
    out_ref[...] = jnp.broadcast_to(psum.reshape(1, 1, 1), out_ref.shape)


def focal_loss(logits, targets, alpha=1.0, gamma=2.0, reduction="mean",
               tile_n=None):
    """Multi-class focal loss.  logits: (N, C) f32/bf16, targets: (N,) int."""
    if reduction not in ("mean", "sum"):
        # TODO(synk): reduction='none' needs a per-row (N,) output spec.
        raise NotImplementedError("only 'mean' and 'sum' reductions are supported")

    N, C = logits.shape
    targets2d = targets.reshape(N, 1).astype(jnp.int32)
    itemsize = jnp.dtype(logits.dtype).itemsize

    # Per-generation VMEM budget.  v5e/v6e: 128 MiB physical per core; v7x has
    # only 64 MiB -- never size as if 128 MiB were available there.
    cap = _vmem_capacity_bytes()
    if cap is not None and cap >= 100 * 2**20:        # v5e / v6e
        row_budget, vmem_limit = 44 * 2**20, 64 * 2**20
    else:                                             # v7x or unknown: conservative
        row_budget, vmem_limit = 26 * 2**20, 40 * 2**20

    if tile_n is None:
        tile_n = _auto_tile_rows(N, C, itemsize, row_budget)
    num_tiles = int(pl.cdiv(N, tile_n))

    cost = pl.CostEstimate(
        flops=int(7 * N * C),
        transcendentals=int(N * C + N),
        bytes_accessed=int(N * C * itemsize + N * 4 + num_tiles * 8 * 128 * 4),
    )

    kernel = functools.partial(
        _focal_loss_kernel,
        alpha=float(alpha), gamma=float(gamma), n=N, tile_n=tile_n,
    )

    partials = pl.pallas_call(
        kernel,
        out_shape=jax.ShapeDtypeStruct((num_tiles, 8, 128), jnp.float32),
        grid=(num_tiles,),
        in_specs=[
            pl.BlockSpec((tile_n, C), lambda i: (i, 0)),
            pl.BlockSpec((tile_n, 1), lambda i: (i, 0)),
        ],
        out_specs=pl.BlockSpec((1, 8, 128), lambda i: (i, 0, 0)),
        compiler_params=pltpu.CompilerParams(
            dimension_semantics=("parallel",),   # independent tiles -> both TCs on v7x
            vmem_limit_bytes=vmem_limit,
        ),
        cost_estimate=cost,
    )(logits, targets2d)

    total = jnp.sum(partials[:, 0, 0])
    if reduction == "mean":
        return total / jnp.float32(N)
    return total


def _focal_loss_ref(logits, targets, alpha=1.0, gamma=2.0, reduction="mean"):
    """Pure-JAX reference mirroring F.cross_entropy(reduction='none') + focal."""
    logits = logits.astype(jnp.float32)
    logp = jax.nn.log_softmax(logits, axis=-1)
    ce = -jnp.take_along_axis(logp, targets[:, None].astype(jnp.int32), axis=-1)[:, 0]
    pt = jnp.exp(-ce)
    focal = alpha * (1.0 - pt) ** gamma * ce
    return jnp.mean(focal) if reduction == "mean" else jnp.sum(focal)


if __name__ == "__main__":
    key = jax.random.PRNGKey(0)
    k1, k2, k3, k4 = jax.random.split(key, 4)

    # Case 1: small aligned shapes, single tile (default auto tiling).
    N1, C1 = 8, 32
    logits1 = jax.random.normal(k1, (N1, C1), dtype=jnp.float32)
    targets1 = jax.random.randint(k2, (N1,), 0, C1, dtype=jnp.int32)
    out1 = jax.block_until_ready(focal_loss(logits1, targets1, alpha=1.0, gamma=2.0))
    ref1 = _focal_loss_ref(logits1, targets1, alpha=1.0, gamma=2.0)
    assert jnp.allclose(out1, ref1, rtol=1e-5, atol=1e-6), (out1, ref1)

    # Case 2: ragged N with a forced small tile -> 5 tiles of 8 rows over N=37,
    # exercising the parallel per-tile partial-sum path + last-tile masking.
    N2, C2 = 37, 48
    logits2 = jax.random.normal(k3, (N2, C2), dtype=jnp.float32)
    targets2 = jax.random.randint(k4, (N2,), 0, C2, dtype=jnp.int32)
    out2 = jax.block_until_ready(
        focal_loss(logits2, targets2, alpha=0.5, gamma=2.0, tile_n=8))
    ref2 = _focal_loss_ref(logits2, targets2, alpha=0.5, gamma=2.0)
    assert jnp.allclose(out2, ref2, rtol=1e-5, atol=1e-6), (out2, ref2)

    # Case 3: bf16 logits (caller-side HBM-traffic halving) + 'sum' reduction.
    logits3 = logits2.astype(jnp.bfloat16)
    out3 = jax.block_until_ready(
        focal_loss(logits3, targets2, alpha=1.0, gamma=2.0, reduction="sum"))
    ref3 = _focal_loss_ref(logits3, targets2, alpha=1.0, gamma=2.0, reduction="sum")
    assert jnp.allclose(out3, ref3, rtol=1e-4, atol=1e-5), (out3, ref3)

    print("KERNEL_OK")
</pallas_src>

<mosaic_0001>
module attributes {stable_mosaic.version = 11 : i64} {
  func.func @_focal_loss_kernel(%arg0: i32, %arg1: memref<8x32xf32, #tpu.memory_space<vmem>>, %arg2: memref<8x1xi32, #tpu.memory_space<vmem>>, %arg3: memref<1x8x128xf32, #tpu.memory_space<vmem>>) attributes {dimension_semantics = [#tpu.dimension_semantics<parallel>], iteration_bounds = array<i64: 1>, scalar_prefetch = 0 : i64, scratch_operands = 0 : i64, tpu.core_type = #tpu.core_type<tc>, window_params = [{transform_indices = @transform_0, window_bounds = array<i64: 8, 32>}, {transform_indices = @transform_1, window_bounds = array<i64: 8, 1>}, {transform_indices = @transform_2, window_bounds = array<i64: 1, 8, 128>}]} {
    %c0 = arith.constant 0 : index
    %c0_0 = arith.constant 0 : index
    %0 = vector.load %arg1[%c0, %c0_0] : memref<8x32xf32, #tpu.memory_space<vmem>>, vector<8x32xf32>
    %c0_1 = arith.constant 0 : index
    %c0_2 = arith.constant 0 : index
    %1 = vector.load %arg2[%c0_1, %c0_2] : memref<8x1xi32, #tpu.memory_space<vmem>>, vector<8x1xi32>
    %c8_i32 = arith.constant 8 : i32
    %2 = arith.muli %arg0, %c8_i32 : i32
    %3 = tpu.iota {dimensions = array<i32: 0>} : vector<8x1xi32>
    %4 = vector.broadcast %2 : i32 to vector<8x1xi32>
    %5 = arith.addi %4, %3 : vector<8x1xi32>
    %c8_i32_3 = arith.constant 8 : i32
    %6 = vector.broadcast %c8_i32_3 : i32 to vector<8x1xi32>
    %7 = arith.cmpi slt, %5, %6 : vector<8x1xi32>
    %8 = tpu.iota {dimensions = array<i32: 1>} : vector<1x32xi32>
    %9 = vector.broadcast %8 : vector<1x32xi32> to vector<8x32xi32>
    %10 = vector.broadcast %1 : vector<8x1xi32> to vector<8x32xi32>
    %11 = arith.cmpi eq, %9, %10 : vector<8x32xi32>
    %cst = arith.constant dense<0xFF800000> : vector<8xf32>
    %12 = vector.multi_reduction <maximumf>, %0, %cst [1] : vector<8x32xf32> to vector<8xf32>
    %13 = vector.shape_cast %12 : vector<8xf32> to vector<8x1xf32>
    %14 = vector.broadcast %13 : vector<8x1xf32> to vector<8x32xf32>
    %15 = arith.subf %0, %14 : vector<8x32xf32>
    %16 = math.exp %15 : vector<8x32xf32>
    %cst_4 = arith.constant dense<0.000000e+00> : vector<8xf32>
    %17 = vector.multi_reduction <add>, %16, %cst_4 [1] : vector<8x32xf32> to vector<8xf32>
    %18 = vector.shape_cast %17 : vector<8xf32> to vector<8x1xf32>
    %cst_5 = arith.constant 0.000000e+00 : f32
    %19 = vector.broadcast %cst_5 : f32 to vector<8x32xf32>
    %20 = arith.select %11, %16, %19 : vector<8x32xi1>, vector<8x32xf32>
    %cst_6 = arith.constant dense<0.000000e+00> : vector<8xf32>
    %21 = vector.multi_reduction <add>, %20, %cst_6 [1] : vector<8x32xf32> to vector<8xf32>
    %22 = vector.shape_cast %21 : vector<8xf32> to vector<8x1xf32>
    %23 = arith.divf %22, %18 : vector<8x1xf32>
    %cst_7 = arith.constant 1.17549435E-38 : f32
    %24 = vector.broadcast %cst_7 : f32 to vector<8x1xf32>
    %25 = arith.maximumf %23, %24 : vector<8x1xf32>
    %26 = math.log %25 : vector<8x1xf32>
    %cst_8 = arith.constant 0.000000e+00 : f32
    %27 = vector.broadcast %cst_8 : f32 to vector<8x1xf32>
    %28 = arith.subf %27, %26 : vector<8x1xf32>
    %cst_9 = arith.constant 1.000000e+00 : f32
    %29 = vector.broadcast %cst_9 : f32 to vector<8x1xf32>
    %30 = arith.subf %29, %25 : vector<8x1xf32>
    %cst_10 = arith.constant 0.000000e+00 : f32
    %31 = vector.broadcast %cst_10 : f32 to vector<8x1xf32>
    %32 = arith.maximumf %30, %31 : vector<8x1xf32>
    %33 = arith.mulf %32, %32 : vector<8x1xf32>
    %cst_11 = arith.constant 1.000000e+00 : f32
    %34 = vector.broadcast %cst_11 : f32 to vector<8x1xf32>
    %35 = arith.mulf %34, %33 : vector<8x1xf32>
    %36 = arith.mulf %35, %28 : vector<8x1xf32>
    %cst_12 = arith.constant 0.000000e+00 : f32
    %37 = vector.broadcast %cst_12 : f32 to vector<8x1xf32>
    %38 = arith.select %7, %36, %37 : vector<8x1xi1>, vector<8x1xf32>
    %39 = vector.shape_cast %38 : vector<8x1xf32> to vector<1x8x1xf32>
    %cst_13 = arith.constant dense<0.000000e+00> : vector<1xf32>
    %40 = vector.multi_reduction <add>, %39, %cst_13 [1, 2] : vector<1x8x1xf32> to vector<1xf32>
    %41 = vector.shape_cast %40 : vector<1xf32> to vector<1x1x1xf32>
    %42 = vector.extract %41[0, 0, 0] : f32 from vector<1x1x1xf32>
    %43 = vector.broadcast %42 : f32 to vector<1x1xf32>
    %44 = vector.shape_cast %43 : vector<1x1xf32> to vector<1x1x1xf32>
    %45 = vector.shape_cast %44 : vector<1x1x1xf32> to vector<1x1x1xf32>
    %46 = vector.broadcast %45 : vector<1x1x1xf32> to vector<1x8x128xf32>
    %c0_14 = arith.constant 0 : index
    %c0_15 = arith.constant 0 : index
    %c0_16 = arith.constant 0 : index
    %47 = vector.load %arg3[%c0_14, %c0_15, %c0_16] : memref<1x8x128xf32, #tpu.memory_space<vmem>>, vector<1x8x128xf32>
    tpu.vector_store %arg3[%c0_14, %c0_15, %c0_16], %46 {strides = array<i32>} : memref<1x8x128xf32, #tpu.memory_space<vmem>>, vector<1x8x128xf32>,
    return
  }
  func.func @transform_0(%arg0: i32) -> (i32, i32) {
    %c0_i32 = arith.constant 0 : i32
    %c0_i32_0 = arith.constant 0 : i32
    return %arg0, %c0_i32 : i32, i32
  }
  func.func @transform_1(%arg0: i32) -> (i32, i32) {
    %c0_i32 = arith.constant 0 : i32
    %c0_i32_0 = arith.constant 0 : i32
    return %arg0, %c0_i32 : i32, i32
  }
  func.func @transform_2(%arg0: i32) -> (i32, i32, i32) {
    %c0_i32 = arith.constant 0 : i32
    %c0_i32_0 = arith.constant 0 : i32
    %c0_i32_1 = arith.constant 0 : i32
    return %arg0, %c0_i32, %c0_i32_0 : i32, i32, i32
  }
}

</mosaic_0001>

<llo_original>
// kernel: tpu_custom_call.1
$region0: #{tpu_custom_call.1}
  #allocation0 [shape = 'u32[]', space=smem, size = 0x4, offset = 0x4, fixed_abs, tag = 'smem constant byte address 0x4 - core index']
  #allocation1 [shape = 'u32[72,128]{1,0:T(1,128)}', space=vmem, size = 0x9000, scoped, tag = 'internal scratch']
  %s0 = inlined_call_operand.vmem [shape: f32[8,32], index: 0, kind: input, shape index: {}]
  %s1 = inlined_call_operand.vmem [shape: s32[8,1], index: 1, kind: input, shape index: {}]
  %s2 = inlined_call_operand.hbm [shape: f32[1,8,128], index: 2, kind: output, shape index: {}]
  %s3 = sld [smem:[#allocation0]]
  $region18: #{tpu_custom_call.1} parent=0
    _
  %s5 = ssub.s32 1, %s3
  %s6 = scalar_select 0, %s5, %s3
  $region1: #{tpu_custom_call.1} parent=0
    #allocation2 [shape = 'u8[4096]{0}', space=vmem, size = 0x1000, scoped, tag = 'output window, operand 0, single buffered']
    #allocation3 [shape = 's32[1]{0}', space=sflag, size = 0x4, scoped, tag = 'scoped memory for tpu_custom_call.1']
    %7 = vsyncpa [#allocation3], 0
    // Predicated region
    $region2: #{tpu_custom_call.1} parent=1 // pred_check
      _
    $region3: #{tpu_custom_call.1} parent=1 // pred_check_branch
      %9 = sbr.rel (0) target = $region5
    $region4: #{tpu_custom_call.1} parent=1 // pred_region
      _
    $region5: #{tpu_custom_call.1} parent=1 // pred_fallthru
      _
    // Predicated region
    $region6: #{tpu_custom_call.1} parent=1 // pred_check
      _
    $region7: #{tpu_custom_call.1} parent=1 // pred_check_branch
      %11 = sbr.rel (0) target = $region9
    $region8: #{tpu_custom_call.1} parent=1 // pred_region
      _
    $region9: #{tpu_custom_call.1} parent=1 // pred_fallthru
      _
    %v12 = vld [vmem:[%s0] sm:$0xff]
    %v13 = vld [vmem:[%s1] sm:$0xff]
    %s14 = smul.u32 0, 8
    %v15 = vlaneseq
    %v16 = vshrl.u32 %v15, 7
    %v17 = vstv %s14
    %v18 = vadd.s32 %v17, %v16
    %vm19 = vcmp.lt.s32.totalorder %v18, 8
    %v20 = vlaneseq
    %v21 = vand.u32 %v20, 127
    %22 = vset.pattern.permute.xlu0 0
    %23 = vperm.xlu0 %22, %v13
    %v24 = vpop.permute.xlu0 %23
    %vm25 = vcmp.eq.s32.totalorder %v21, %v24
    %vm26 = vcmask 261120
    %v27 = vsel %vm26, %v12, -inf
    %28 = vmax.xlane.f32.xlu0 %v27
    %v29 = vpop.xlane.xlu0 %28
    %v30 = vsub.f32 %v12, %v29
    %v31 = vmul.f32 %v30, 1.442695
    %v32 = vpow.pop %v31
    %v33 = vsel %vm26, %v32, 0.0
    %34 = vadd.xlane.f32.xlu0 %v33
    %v35 = vpop.xlane.xlu0 %34
    %v36 = vsel %vm25, %v32, 0.0
    %v37 = vsel %vm26, %v36, 0.0
    %38 = vadd.xlane.f32.xlu0 %v37
    %v39 = vpop.xlane.xlu0 %38
    %v40 = vrcp.pop %v35
    %v41 = vmul.f32 %v35, %v40
    %v42 = vsub.f32 1.0, %v41
    %v43 = vmul.f32 %v40, %v42
    %v44 = vadd.f32 %v40, %v43
    %vm45 = vweird.f32 %v35
    %vm46 = vweird.f32 %v40
    %vm47 = vmor %vm45, %vm46
    %v48 = vsel %vm47, %v40, %v44
    %v49 = vand.u32 2147483647, %v35
    %vm50 = vcmp.eq.f32.partialorder %v49, 8.507059e+37
    %v51 = vand.u32 %v35, 2147483648
    %v52 = vor.u32 1.1754944e-38, %v51
    %v53 = vsel %vm50, %v52, %v48
    %v54 = vmul.f32 %v39, %v53
    %v55 = vmax.f32 %v54, 1.1754944e-38
    %v56 = vlog2.pop %v55
    %v57 = vmul.f32 %v56, 0.6931472
    %v58 = vsub.f32 0.0, %v57
    %v59 = vsub.f32 1.0, %v55
    %v60 = vmax.f32 %v59, 0.0
    %v61 = vmul.f32 %v60, %v60
    %v62 = vmul.f32 %v61, %v58
    %v63 = vsel %vm19, %v62, 0.0
    %vm64 = vcmask 7168
    %v65 = vsel %vm64, %v63, 0.0
    %66 = vadd.xlane.f32.xlu0 %v65
    %v67 = vpop.xlane.xlu0 %66
    %v68 = vrot.slane %v67, 4
    %v69 = vadd.f32 %v67, %v68
    %v70 = vrot.slane %v69, 2
    %v71 = vadd.f32 %v69, %v70
    %v72 = vrot.slane %v71, 1
    %v73 = vadd.f32 %v71, %v72
    %s74 = vtos %v73
    %v75 = vstv %s74
    %76 = vst [vmem:[#allocation2] sm:$0xff] %v75
    // Predicated region
    $region10: #{tpu_custom_call.1} parent=1 // pred_check
      _
    $region11: #{tpu_custom_call.1} parent=1 // pred_check_branch
      %78 = sbr.rel (0) target = $region13
    $region12: #{tpu_custom_call.1} parent=1 // pred_region
      %80 = vsyncadd [#allocation3], 0
      %s82 = sshll.u32 [#allocation2], 4
      %s83 = int_to_ptr.vmem [resolvable:$true] %s82
      %s84 = sshll.u32 %s2, 4
      %s85 = int_to_ptr.hbm [resolvable:$true] %s84
      %87 = dma.vmem_to_hbm [thread:$0]  %s83, 128, %s85, [#allocation3]
    $region13: #{tpu_custom_call.1} parent=1 // pred_fallthru
      _
    // Predicated region
    $region14: #{tpu_custom_call.1} parent=1 // pred_check
      _
    $region15: #{tpu_custom_call.1} parent=1 // pred_check_branch
      %89 = sbr.rel (0) target = $region17
    $region16: #{tpu_custom_call.1} parent=1 // pred_region
      %91 = dma.done [#allocation3], 128
    $region17: #{tpu_custom_call.1} parent=1 // pred_fallthru
      _
    %92 = vsyncpa [#allocation3], 1

</llo_original>
